<compile_context>
chip_gen: v6e
topology: v6e:2x2x1
jax: 0.10.0
libtpu: 0.0.40
codegen_flags: <defaults>
</compile_context>

<pallas_src>
import jax
import jax.numpy as jnp
from jax.experimental import pallas as pl
from jax.experimental.pallas import tpu as pltpu


# ----------------------------- Pallas kernel ------------------------------- #
def _exp_feature_kernel(a_ref, lmd_ref, rho_ref, out_ref):
    # a_ref:   (R, M, TN)  positive abelian part a(x h^{-1}); batch N on lanes,
    #                      M on sublanes (dense), rank R on the leading axis.
    # lmd_ref: (R, M)      spectral parameters lambda (transposed).
    # rho_ref: (R, 1)      half-sum of positive roots rho.
    # out_ref: (2, M, TN)  [0] = real part, [1] = imag part (lane-dense stores).
    log_a = jnp.log(a_ref[...])                         # (R, M, TN)  EUP
    rho = rho_ref[...][:, :, None]                      # (R, 1, 1)
    lmd = lmd_ref[...][:, :, None]                      # (R, M, 1)
    # <log a, i*lmd + rho>: real part uses rho, imaginary part uses lmd.
    # Reduce over the tiny leading rank axis: R-1 plain vreg adds (VPU).
    re = jnp.sum(log_a * rho, axis=0)                   # (M, TN)
    im = jnp.sum(log_a * lmd, axis=0)                   # (M, TN)
    mag = jnp.exp(re)                                   # EUP
    out_ref[0, :, :] = mag * jnp.cos(im)
    out_ref[1, :, :] = mag * jnp.sin(im)


def _num_tensorcores():
    # v7x has 2 TensorCores per chip; v5e/v6e have 1.  Splitting the grid only
    # pays off when there are really 2 cores to shard the "parallel" axis onto.
    try:
        kind = jax.devices()[0].device_kind.lower()
    except Exception:
        return 1
    return 2 if "v7" in kind else 1


def noncompact_exp_pallas(a, lmd, rho, *, tile_n=8192, num_cores=None):
    """Computes exp(<log a, i*lmd + rho>) -> complex64 array of shape (N, M).

    a: (N, M, R) positive;  lmd: (M, R);  rho: (R,).
    """
    n, m, r = a.shape
    if num_cores is None:
        num_cores = _num_tensorcores()

    # (N, M, R) -> (R, M, N): batch on lanes, M on sublanes (dense), R leading.
    # Single layout-plumbing pass; the kernel itself is EUP-bound.
    a_t = jnp.transpose(a, (2, 1, 0)).astype(jnp.float32)
    lmd_t = jnp.transpose(lmd, (1, 0)).astype(jnp.float32)   # (R, M)
    rho_c = rho.reshape(r, 1).astype(jnp.float32)             # (R, 1)

    # Lane tiling: k = number of 128-lane chunks needed for N.
    k = pl.cdiv(n, 128)
    max_k_per_block = max(1, tile_n // 128)
    num_blocks = pl.cdiv(k, max_k_per_block)
    # Only force a multi-block split when the chip actually has >1 TensorCore.
    if num_cores >= 2 and num_blocks < num_cores and k >= num_cores:
        num_blocks = num_cores
    kb = pl.cdiv(k, num_blocks)
    tile = kb * 128
    n_pad = tile * num_blocks

    if n_pad != n:
        # pad with 1.0 -> log() == 0 -> padded lanes stay finite; sliced off below
        a_t = jnp.pad(a_t, ((0, 0), (0, 0), (0, n_pad - n)), constant_values=1.0)

    out = pl.pallas_call(
        _exp_feature_kernel,
        out_shape=jax.ShapeDtypeStruct((2, m, n_pad), jnp.float32),
        grid_spec=pltpu.PrefetchScalarGridSpec(
            num_scalar_prefetch=0,
            grid=(num_blocks,),
            in_specs=[pl.BlockSpec((r, m, tile), lambda i: (0, 0, i)),
                      pl.BlockSpec((r, m), lambda i: (0, 0)),
                      pl.BlockSpec((r, 1), lambda i: (0, 0))],
            out_specs=pl.BlockSpec((2, m, tile), lambda i: (0, 0, i))),
        compiler_params=pltpu.CompilerParams(
            dimension_semantics=("parallel",)),
    )(a_t, lmd_t, rho_c)

    real = out[0, :, :n]                                # (M, N)
    imag = out[1, :, :n]
    return (real + 1j * imag).T                         # (N, M) complex64


# ----------------------------- JAX glue module ----------------------------- #
class GLnSymmetricSpaceExp:
    """JAX port of NonCompactSymmetricSpaceExp for G = GL(n,R)^+ (SPD space).

    For x in G computes e^{(i*lmd + rho) a(x h^{-1})}.
    """

    def __init__(self, lmd, shift, dim):
        self.lmd = lmd                 # (order, rank), rank == dim
        self.shift = shift             # (order, dim, dim) group elements
        self.order = lmd.shape[0]
        self.n = dim
        self.rho = self.compute_rho()  # (rank,)

    def compute_rho(self):
        d = self.n
        # half-sum of positive roots of gl(n): ((n-1)/2, (n-3)/2, ..., -(n-1)/2)
        return (d - 1 - 2.0 * jnp.arange(d, dtype=jnp.float32)) / 2.0

    def pairwise_diff(self, x, shift):
        # y[n, m] = x[n] @ shift[m]^{-1}; computed via a linear solve (more
        # numerically stable than forming inv(shift)).
        xt = jnp.swapaxes(x, -1, -2)[:, None]           # (N, 1, d, d)
        st = jnp.swapaxes(shift, -1, -2)[None, :]       # (1, M, d, d)
        yt = jnp.linalg.solve(st, xt)                   # (N, M, d, d)
        y = jnp.swapaxes(yt, -1, -2)
        return y.reshape(-1, self.n, self.n)

    def iwasawa_decomposition(self, x):
        # x = h a n with h orthogonal, a diag positive, n unit upper triangular.
        q, r = jnp.linalg.qr(x)
        diag = jnp.diagonal(r, axis1=-2, axis2=-1)      # (B, d)
        s = jnp.sign(diag)
        a = jnp.abs(diag)                               # positive abelian part
        h = q * s[:, None, :]
        nmat = (r * s[:, :, None]) / a[:, :, None]
        return h, a, nmat

    def forward(self, x):
        n = x.shape[0]
        x_shift_flatten = self.pairwise_diff(x, self.shift)
        _, a_flatten, _ = self.iwasawa_decomposition(x_shift_flatten)
        a = a_flatten.reshape(n, self.order, -1)        # (N, order, rank)
        # hot path (log -> complex linear functional -> exp) runs in Pallas
        return noncompact_exp_pallas(a, self.lmd, self.rho)


# ------------------------------- reference --------------------------------- #
def reference(a, lmd, rho):
    log_a = jnp.log(a)
    re = jnp.einsum('nmr,r->nm', log_a, rho)
    im = jnp.einsum('nmr,mr->nm', log_a, lmd)
    return jnp.exp(re) * (jnp.cos(im) + 1j * jnp.sin(im))


if __name__ == "__main__":
    key = jax.random.PRNGKey(0)
    k1, k2, k3 = jax.random.split(key, 3)

    batch, order, dim = 256, 16, 4     # N, M, rank R == dim

    # deterministic "parameters": shift points in G and spectral samples lmd
    x = jnp.eye(dim, dtype=jnp.float32) + 0.25 * jax.random.normal(
        k1, (batch, dim, dim), dtype=jnp.float32)
    shift = jnp.eye(dim, dtype=jnp.float32) + 0.25 * jax.random.normal(
        k2, (order, dim, dim), dtype=jnp.float32)
    lmd = jax.random.normal(k3, (order, dim), dtype=jnp.float32)

    mod = GLnSymmetricSpaceExp(lmd, shift, dim)
    out = jax.block_until_ready(mod.forward(x))

    # validate the Pallas hot path against a pure-JAX reference
    a_chk = mod.iwasawa_decomposition(mod.pairwise_diff(x, shift))[1].reshape(
        batch, order, dim)
    ref = reference(a_chk, lmd, mod.rho)

    assert out.shape == (batch, order)
    assert jnp.allclose(out, ref, rtol=5e-4, atol=1e-5), "mismatch vs reference"
    # TODO(synk): PyTorch version runs in complex128; TPU has no f64 so this is complex64.
    print("KERNEL_OK")
</pallas_src>

<mosaic_0001>
module attributes {stable_mosaic.version = 11 : i64} {
  func.func @_exp_feature_kernel(%arg0: i32, %arg1: memref<4x16x256xf32, #tpu.memory_space<vmem>>, %arg2: memref<4x16xf32, #tpu.memory_space<vmem>>, %arg3: memref<4x1xf32, #tpu.memory_space<vmem>>, %arg4: memref<2x16x256xf32, #tpu.memory_space<vmem>>) attributes {dimension_semantics = [#tpu.dimension_semantics<parallel>], iteration_bounds = array<i64: 1>, scalar_prefetch = 0 : i64, scratch_operands = 0 : i64, tpu.core_type = #tpu.core_type<tc>, window_params = [{transform_indices = @transform_0, window_bounds = array<i64: 4, 16, 256>}, {pipeline_mode = #tpu.pipeline_mode<synchronous>, transform_indices = @transform_1, window_bounds = array<i64: 4, 16>}, {pipeline_mode = #tpu.pipeline_mode<synchronous>, transform_indices = @transform_2, window_bounds = array<i64: 4, 1>}, {transform_indices = @transform_3, window_bounds = array<i64: 2, 16, 256>}]} {
    %c0 = arith.constant 0 : index
    %c0_0 = arith.constant 0 : index
    %c0_1 = arith.constant 0 : index
    %0 = vector.load %arg1[%c0, %c0_0, %c0_1] : memref<4x16x256xf32, #tpu.memory_space<vmem>>, vector<4x16x256xf32>
    %1 = math.log %0 : vector<4x16x256xf32>
    %c0_2 = arith.constant 0 : index
    %c0_3 = arith.constant 0 : index
    %2 = vector.load %arg3[%c0_2, %c0_3] : memref<4x1xf32, #tpu.memory_space<vmem>>, vector<4x1xf32>
    %3 = vector.shape_cast %2 : vector<4x1xf32> to vector<4x1x1xf32>
    %c0_4 = arith.constant 0 : index
    %c0_5 = arith.constant 0 : index
    %4 = vector.load %arg2[%c0_4, %c0_5] : memref<4x16xf32, #tpu.memory_space<vmem>>, vector<4x16xf32>
    %5 = vector.shape_cast %4 : vector<4x16xf32> to vector<4x16x1xf32>
    %6 = vector.broadcast %3 : vector<4x1x1xf32> to vector<4x16x256xf32>
    %7 = arith.mulf %1, %6 : vector<4x16x256xf32>
    %cst = arith.constant dense<0.000000e+00> : vector<16x256xf32>
    %8 = vector.multi_reduction <add>, %7, %cst [0] : vector<4x16x256xf32> to vector<16x256xf32>
    %9 = vector.broadcast %5 : vector<4x16x1xf32> to vector<4x16x256xf32>
    %10 = arith.mulf %1, %9 : vector<4x16x256xf32>
    %cst_6 = arith.constant dense<0.000000e+00> : vector<16x256xf32>
    %11 = vector.multi_reduction <add>, %10, %cst_6 [0] : vector<4x16x256xf32> to vector<16x256xf32>
    %12 = math.exp %8 : vector<16x256xf32>
    %13 = math.cos %11 : vector<16x256xf32>
    %14 = arith.mulf %12, %13 : vector<16x256xf32>
    %c0_7 = arith.constant 0 : index
    %c0_8 = arith.constant 0 : index
    %c0_9 = arith.constant 0 : index
    %15 = vector.load %arg4[%c0_7, %c0_8, %c0_9] : memref<2x16x256xf32, #tpu.memory_space<vmem>>, vector<1x16x256xf32>
    %16 = vector.shape_cast %15 : vector<1x16x256xf32> to vector<16x256xf32>
    %17 = vector.shape_cast %14 : vector<16x256xf32> to vector<1x16x256xf32>
    tpu.vector_store %arg4[%c0_7, %c0_8, %c0_9], %17 {strides = array<i32>} : memref<2x16x256xf32, #tpu.memory_space<vmem>>, vector<1x16x256xf32>,
    %18 = math.sin %11 : vector<16x256xf32>
    %19 = arith.mulf %12, %18 : vector<16x256xf32>
    %c1 = arith.constant 1 : index
    %c0_10 = arith.constant 0 : index
    %c0_11 = arith.constant 0 : index
    %20 = vector.load %arg4[%c1, %c0_10, %c0_11] : memref<2x16x256xf32, #tpu.memory_space<vmem>>, vector<1x16x256xf32>
    %21 = vector.shape_cast %20 : vector<1x16x256xf32> to vector<16x256xf32>
    %22 = vector.shape_cast %19 : vector<16x256xf32> to vector<1x16x256xf32>
    tpu.vector_store %arg4[%c1, %c0_10, %c0_11], %22 {strides = array<i32>} : memref<2x16x256xf32, #tpu.memory_space<vmem>>, vector<1x16x256xf32>,
    return
  }
  func.func @transform_0(%arg0: i32) -> (i32, i32, i32) {
    %c0_i32 = arith.constant 0 : i32
    %c0_i32_0 = arith.constant 0 : i32
    %c0_i32_1 = arith.constant 0 : i32
    return %c0_i32, %c0_i32_0, %arg0 : i32, i32, i32
  }
  func.func @transform_1(%arg0: i32) -> (i32, i32) {
    %c0_i32 = arith.constant 0 : i32
    %c0_i32_0 = arith.constant 0 : i32
    %c0_i32_1 = arith.constant 0 : i32
    return %c0_i32, %c0_i32_0 : i32, i32
  }
  func.func @transform_2(%arg0: i32) -> (i32, i32) {
    %c0_i32 = arith.constant 0 : i32
    %c0_i32_0 = arith.constant 0 : i32
    %c0_i32_1 = arith.constant 0 : i32
    return %c0_i32, %c0_i32_0 : i32, i32
  }
  func.func @transform_3(%arg0: i32) -> (i32, i32, i32) {
    %c0_i32 = arith.constant 0 : i32
    %c0_i32_0 = arith.constant 0 : i32
    %c0_i32_1 = arith.constant 0 : i32
    return %c0_i32, %c0_i32_0, %arg0 : i32, i32, i32
  }
}

</mosaic_0001>

<llo_original>
// kernel: tpu_custom_call.1
$region0: #{tpu_custom_call.1}
  #allocation0 [shape = 'u32[]', space=smem, size = 0x4, offset = 0x4, fixed_abs, tag = 'smem constant byte address 0x4 - core index']
  #allocation1 [shape = 'u32[144,128]{1,0:T(1,128)}', space=vmem, size = 0x12000, scoped, tag = 'internal scratch']
  %s0 = inlined_call_operand.hbm [shape: f32[4,16,256], index: 0, kind: input, shape index: {}]
  %s1 = inlined_call_operand.vmem [shape: f32[4,16], index: 1, kind: input, shape index: {}]
  %s2 = inlined_call_operand.vmem [shape: f32[4,1], index: 2, kind: input, shape index: {}]
  %s3 = inlined_call_operand.hbm [shape: f32[2,16,256], index: 3, kind: output, shape index: {}]
  %s4 = sld [smem:[#allocation0]]
  $region26: #{tpu_custom_call.1} parent=0
    _
  %s6 = ssub.s32 1, %s4
  %s7 = scalar_select 0, %s6, %s4
  $region1: #{tpu_custom_call.1} parent=0
    #allocation2 [shape = 'u8[65536]{0}', space=vmem, size = 0x10000, scoped, tag = 'input window, operand 0, single buffered']
    #allocation3 [shape = 's32[1]{0}', space=sflag, size = 0x4, scoped, tag = 'scoped memory for tpu_custom_call.1']
    #allocation4 [shape = 's32[1]{0}', space=sflag, size = 0x4, scoped, tag = 'scoped memory for tpu_custom_call.1']
    #allocation5 [shape = 'u8[32768]{0}', space=vmem, size = 0x8000, scoped, tag = 'output window, operand 0, single buffered']
    %8 = vsyncpa [#allocation3], 0
    %9 = vsyncpa [#allocation4], 0
    // Predicated region
    $region2: #{tpu_custom_call.1} parent=1 // pred_check
      _
    $region3: #{tpu_custom_call.1} parent=1 // pred_check_branch
      %11 = sbr.rel (0) target = $region5
    $region4: #{tpu_custom_call.1} parent=1 // pred_region
      %s13 = ssub.s32 2048, 2048
      %14 = vsyncadd [#allocation3], %s13
      %s15 = sshll.u32 [#allocation2], 4
      %s16 = int_to_ptr.vmem [resolvable:$true] %s15
      %21 = dma.hbm_to_vmem [thread:$0]  %s0, 2048, %s16, [#allocation3], 256, 256, 16
    $region5: #{tpu_custom_call.1} parent=1 // pred_fallthru
      _
    // Predicated region
    $region6: #{tpu_custom_call.1} parent=1 // pred_check
      _
    $region7: #{tpu_custom_call.1} parent=1 // pred_check_branch
      %23 = sbr.rel (0) target = $region9
    $region8: #{tpu_custom_call.1} parent=1 // pred_region
      _
    $region9: #{tpu_custom_call.1} parent=1 // pred_fallthru
      _
    // Predicated region
    $region10: #{tpu_custom_call.1} parent=1 // pred_check
      _
    $region11: #{tpu_custom_call.1} parent=1 // pred_check_branch
      %25 = sbr.rel (0) target = $region13
    $region12: #{tpu_custom_call.1} parent=1 // pred_region
      _
    $region13: #{tpu_custom_call.1} parent=1 // pred_fallthru
      _
    // Predicated region
    $region14: #{tpu_custom_call.1} parent=1 // pred_check
      _
    $region15: #{tpu_custom_call.1} parent=1 // pred_check_branch
      %27 = sbr.rel (0) target = $region17
    $region16: #{tpu_custom_call.1} parent=1 // pred_region
      %28 = dma.done [#allocation3], 2048
    $region17: #{tpu_custom_call.1} parent=1 // pred_fallthru
      _
    %v29 = vld [vmem:[#allocation2] sm:$0xff]
    %v30 = vld [vmem:[#allocation2 + $0x8] sm:$0xff]
    %v31 = vld [vmem:[#allocation2 + $0x10] sm:$0xff]
    %v32 = vld [vmem:[#allocation2 + $0x18] sm:$0xff]
    %v33 = vld [vmem:[#allocation2 + $0x20] sm:$0xff]
    %v34 = vld [vmem:[#allocation2 + $0x28] sm:$0xff]
    %v35 = vld [vmem:[#allocation2 + $0x30] sm:$0xff]
    %v36 = vld [vmem:[#allocation2 + $0x38] sm:$0xff]
    %v37 = vld [vmem:[#allocation2 + $0x40] sm:$0xff]
    %v38 = vld [vmem:[#allocation2 + $0x48] sm:$0xff]
    %v39 = vld [vmem:[#allocation2 + $0x50] sm:$0xff]
    %v40 = vld [vmem:[#allocation2 + $0x58] sm:$0xff]
    %v41 = vld [vmem:[#allocation2 + $0x60] sm:$0xff]
    %v42 = vld [vmem:[#allocation2 + $0x68] sm:$0xff]
    %v43 = vld [vmem:[#allocation2 + $0x70] sm:$0xff]
    %v44 = vld [vmem:[#allocation2 + $0x78] sm:$0xff]
    %v45 = vlog2.pop %v29
    %v46 = vmul.f32 %v45, 0.6931472
    %v47 = vlog2.pop %v30
    %v48 = vmul.f32 %v47, 0.6931472
    %v49 = vlog2.pop %v31
    %v50 = vmul.f32 %v49, 0.6931472
    %v51 = vlog2.pop %v32
    %v52 = vmul.f32 %v51, 0.6931472
    %v53 = vlog2.pop %v33
    %v54 = vmul.f32 %v53, 0.6931472
    %v55 = vlog2.pop %v34
    %v56 = vmul.f32 %v55, 0.6931472
    %v57 = vlog2.pop %v35
    %v58 = vmul.f32 %v57, 0.6931472
    %v59 = vlog2.pop %v36
    %v60 = vmul.f32 %v59, 0.6931472
    %v61 = vlog2.pop %v37
    %v62 = vmul.f32 %v61, 0.6931472
    %v63 = vlog2.pop %v38
    %v64 = vmul.f32 %v63, 0.6931472
    %v65 = vlog2.pop %v39
    %v66 = vmul.f32 %v65, 0.6931472
    %v67 = vlog2.pop %v40
    %v68 = vmul.f32 %v67, 0.6931472
    %v69 = vlog2.pop %v41
    %v70 = vmul.f32 %v69, 0.6931472
    %v71 = vlog2.pop %v42
    %v72 = vmul.f32 %v71, 0.6931472
    %v73 = vlog2.pop %v43
    %v74 = vmul.f32 %v73, 0.6931472
    %v75 = vlog2.pop %v44
    %v76 = vmul.f32 %v75, 0.6931472
    %v77 = vld [vmem:[%s2] sm:$0xf]
    %v80 = vunpack.c.l.s4 1966171168
    %v81 = vunpack.c.0.s8 %v80
    %v82 = vlaneseq
    %v83 = vshrl.u32 %v82, 7
    %v84 = vsub.s32 %v81, %v83
    %v85 = vrot.slane %v77, %v84
    %v86 = vcombine.high %v85, %v85
    %v88 = vunpack.c.l.s4 1966171168
    %v89 = vunpack.c.0.s8 %v88
    %v90 = vlaneseq
    %v91 = vshrl.u32 %v90, 7
    %v92 = vsub.s32 %v89, %v91
    %v93 = vrot.slane %v85, %v92
    %v95 = vunpack.c.l.s4 1966171168
    %v96 = vunpack.c.0.s8 %v95
    %v97 = vlaneseq
    %v98 = vshrl.u32 %v97, 7
    %v99 = vsub.s32 %v96, %v98
    %v100 = vrot.slane %v86, %v99
    %v101 = vcombine.high %v93, %v93
    %v102 = vcombine.high %v100, %v100
    %v103 = vld [vmem:[%s1] sm:$0xf]
    %v104 = vlaneseq
    %v105 = vshrl.u32 %v104, 7
    %v106 = vsub.s32 0, %v105
    %v107 = vrot.slane %v103, %v106
    %109 = vbcast.lane.b32.xlu0 %v107, 256
    %v110 = vpop.permute.xlu0 %109
    %s112 = sor.u32 256, 8
    %113 = vbcast.lane.b32.xlu0 %v107, %s112
    %v114 = vpop.permute.xlu0 %113
    %v115 = vlaneseq
    %v116 = vshrl.u32 %v115, 7
    %v117 = vsub.s32 1, %v116
    %v118 = vrot.slane %v103, %v117
    %120 = vbcast.lane.b32.xlu0 %v118, 256
    %v121 = vpop.permute.xlu0 %120
    %s123 = sor.u32 256, 8
    %124 = vbcast.lane.b32.xlu0 %v118, %s123
    %v125 = vpop.permute.xlu0 %124
    %v126 = vlaneseq
    %v127 = vshrl.u32 %v126, 7
    %v128 = vsub.s32 2, %v127
    %v129 = vrot.slane %v103, %v128
    %131 = vbcast.lane.b32.xlu0 %v129, 256
    %v132 = vpop.permute.xlu0 %131
    %s134 = sor.u32 256, 8
    %135 = vbcast.lane.b32.xlu0 %v129, %s134
    %v136 = vpop.permute.xlu0 %135
    %v137 = vlaneseq
    %v138 = vshrl.u32 %v137, 7
    %v139 = vsub.s32 3, %v138
    %v140 = vrot.slane %v103, %v139
    %142 = vbcast.lane.b32.xlu0 %v140, 256
    %v143 = vpop.permute.xlu0 %142
    %s145 = sor.u32 256, 8
    %146 = vbcast.lane.b32.xlu0 %v140, %s145
    %v147 = vpop.permute.xlu0 %146
    %v148 = vlaneseq
    %v149 = vshrl.u32 %v148, 7
    %v150 = vsub.s32 0, %v149
    %v151 = vrot.slane %v93, %v150
    %v152 = vlaneseq
    %v153 = vshrl.u32 %v152, 7
    %v154 = vsub.s32 0, %v153
    %v155 = vrot.slane %v100, %v154
    %v156 = vlaneseq
    %v157 = vshrl.u32 %v156, 7
    %v158 = vsub.s32 0, %v157
    %v159 = vrot.slane %v101, %v158
    %v160 = vlaneseq
    %v161 = vshrl.u32 %v160, 7
    %v162 = vsub.s32 0, %v161
    %v163 = vrot.slane %v102, %v162
    %164 = vset.pattern.permute.xlu0 0
    %165 = vperm.xlu0 %164, %v151
    %v166 = vpop.permute.xlu0 %165
    %168 = vset.pattern.permute.xlu0 0
    %169 = vperm.xlu0 %168, %v155
    %v170 = vpop.permute.xlu0 %169
    %172 = vset.pattern.permute.xlu0 0
    %173 = vperm.xlu0 %172, %v159
    %v174 = vpop.permute.xlu0 %173
    %176 = vset.pattern.permute.xlu0 0
    %177 = vperm.xlu0 %176, %v163
    %v178 = vpop.permute.xlu0 %177
    %v180 = vmul.f32 %v46, %v166
    %v181 = vmul.f32 %v48, %v166
    %v182 = vmul.f32 %v50, %v166
    %v183 = vmul.f32 %v52, %v166
    %v184 = vmul.f32 %v54, %v170
    %v185 = vmul.f32 %v56, %v170
    %v186 = vmul.f32 %v58, %v170
    %v187 = vmul.f32 %v60, %v170
    %v188 = vmul.f32 %v62, %v174
    %v189 = vmul.f32 %v64, %v174
    %v190 = vmul.f32 %v66, %v174
    %v191 = vmul.f32 %v68, %v174
    %v192 = vmul.f32 %v70, %v178
    %v193 = vmul.f32 %v72, %v178
    %v194 = vmul.f32 %v74, %v178
    %v195 = vmul.f32 %v76, %v178
    %v196 = vadd.f32 %v180, %v184
    %v197 = vadd.f32 %v196, %v188
    %v198 = vadd.f32 %v197, %v192
    %v199 = vadd.f32 %v181, %v185
    %v200 = vadd.f32 %v199, %v189
    %v201 = vadd.f32 %v200, %v193
    %v202 = vadd.f32 %v182, %v186
    %v203 = vadd.f32 %v202, %v190
    %v204 = vadd.f32 %v203, %v194
    %v205 = vadd.f32 %v183, %v187
    %v206 = vadd.f32 %v205, %v191
    %v207 = vadd.f32 %v206, %v195
    %v208 = vmul.f32 %v46, %v110
    %v209 = vmul.f32 %v48, %v110
    %v210 = vmul.f32 %v50, %v114
    %v211 = vmul.f32 %v52, %v114
    %v212 = vmul.f32 %v54, %v121
    %v213 = vmul.f32 %v56, %v121
    %v214 = vmul.f32 %v58, %v125
    %v215 = vmul.f32 %v60, %v125
    %v216 = vmul.f32 %v62, %v132
    %v217 = vmul.f32 %v64, %v132
    %v218 = vmul.f32 %v66, %v136
    %v219 = vmul.f32 %v68, %v136
    %v220 = vmul.f32 %v70, %v143
    %v221 = vmul.f32 %v72, %v143
    %v222 = vmul.f32 %v74, %v147
    %v223 = vmul.f32 %v76, %v147
    %v224 = vadd.f32 %v208, %v212
    %v225 = vadd.f32 %v224, %v216
    %v226 = vadd.f32 %v225, %v220
    %v227 = vadd.f32 %v209, %v213
    %v228 = vadd.f32 %v227, %v217
    %v229 = vadd.f32 %v228, %v221
    %v230 = vadd.f32 %v210, %v214
    %v231 = vadd.f32 %v230, %v218
    %v232 = vadd.f32 %v231, %v222
    %v233 = vadd.f32 %v211, %v215
    %v234 = vadd.f32 %v233, %v219
    %v235 = vadd.f32 %v234, %v223
    %v236 = vmul.f32 %v198, 1.442695
    %v237 = vpow.pop %v236
    %v238 = vmul.f32 %v201, 1.442695
    %v239 = vpow.pop %v238
    %v240 = vmul.f32 %v204, 1.442695
    %v241 = vpow.pop %v240
    %v242 = vmul.f32 %v207, 1.442695
    %v243 = vpow.pop %v242
    %v244 = vand.u32 2147483647, %v226
    %vm245 = vcmp.le.f32.partialorder %v244, 0.7853982
    %vm246 = vcmp.lt.s32.totalorder %v226, 0
    %v247 = vand.u32 %v226, 2139095040
    %v248 = vshrl.u32 %v247, 23
    %v249 = vsub.s32 %v248, 127
    %v250 = vand.u32 2147483647, %v226
    %v251 = vand.u32 %v250, 8388607
    %v252 = vor.u32 %v251, 8388608
    %v253 = vsub.s32 0, %v252
    %v254 = vadd.s32 %v249, 1
    %vm255 = vcmp.gt.s32.totalorder %v254, 0
    %v256 = vsel %vm255, %v254, 0
    %v257 = vshrl.u32 %v256, 5
    %v258 = vand.u32 %v256, 31
    %v259 = vsub.s32 32, %v258
    %v260 = vshrl.u32 683565275, %v259
    %v261 = vshll.u32 683565275, %v258
    %v262 = vshrl.u32 2475754826, %v259
    %v263 = vor.u32 %v261, %v262
    %v264 = vshll.u32 2475754826, %v258
    %v265 = vshrl.u32 2131351028, %v259
    %v266 = vor.u32 %v264, %v265
    %v267 = vshll.u32 2131351028, %v258
    %v268 = vshrl.u32 2102212464, %v259
    %v269 = vor.u32 %v267, %v268
    %v270 = vshll.u32 2102212464, %v258
    %v271 = vshrl.u32 920167782, %v259
    %v272 = vor.u32 %v270, %v271
    %v273 = vshll.u32 920167782, %v258
    %v274 = vshrl.u32 1326507024, %v259
    %v275 = vor.u32 %v273, %v274
    %vm276 = vcmp.lt.s32.totalorder %v257, 1
    %vm277 = vcmp.lt.s32.totalorder %v257, 2
    %vm278 = vcmp.lt.s32.totalorder %v257, 3
    %vm279 = vcmp.lt.s32.totalorder %v257, 4
    %v280 = vsel %vm276, %v260, %v263
    %v281 = vsel %vm279, %v269, 2102212464
    %v282 = vsel %vm278, %v266, %v281
    %v283 = vsel %vm277, %v280, %v282
    %v284 = vsel %vm276, %v263, %v266
    %v285 = vsel %vm279, %v272, 920167782
    %v286 = vsel %vm278, %v269, %v285
    %v287 = vsel %vm277, %v284, %v286
    %v288 = vsel %vm276, %v266, %v269
    %v289 = vsel %vm279, %v275, 1326507024
    %v290 = vsel %vm278, %v272, %v289
    %v291 = vsel %vm277, %v288, %v290
    %v292 = vshll.u32 %v252, 8
    %v293 = vmul.u32.u64.compose %v292, %v291
    %v294 = vextract.low.u32 %v293
    %v295 = vextract.high.u32 %v293
    %v296 = vmul.u32.u64.compose %v292, %v287
    %v297 = vextract.low.u32 %v296
    %v298 = vextract.high.u32 %v296
    %v299 = vmul.u32 %v292, %v283
    %v300 = vadd.s32 %v295, %v297
    %vm301 = vc.u32 %v295, %v297
    %v302 = vadd.s32 %v298, 1
    %v303 = vsel %vm301, %v302, %v298
    %v304 = vadd.s32 %v299, %v303
    %v305 = vadd.s32 %v304, 536870912
    %v306 = vshrl.u32 %v305, 30
    %v307 = vshll.u32 %v306, 30
    %v308 = vsub.s32 %v304, %v307
    %vm309 = vcmp.lt.s32.totalorder %v308, 0
    %v310 = vsub.s32 0, %v308
    %v311 = vsel %vm309, %v310, %v308
    %v312 = vclz %v311
    %v313 = vsub.s32 %v312, 2
    %vm314 = vcmp.gt.s32.totalorder 0, %v313
    %v315 = vsel %vm314, 0, %v313
    %v316 = vsub.s32 32, %v315
    %v317 = vshll.u32 %v308, %v315
    %v318 = vshrl.u32 %v300, %v316
    %v319 = vor.u32 %v317, %v318
    %v320 = vsub.s32 4294967266, %v315
    %v321 = vadd.s32 %v320, 127
    %v322 = vshll.u32 %v321, 23
    %v323 = vor.u32 4788187, %v322
    %v324 = vand.u32 2147483647, %v323
    %v326 = vcvt.s32.f32 %v319
    %v327 = vmul.f32 %v326, %v324
    %v328 = vxor.u32 %v327, 2147483648
    %v329 = vsel %vm246, %v328, %v327
    %v330 = vsub.s32 4, %v306
    %v331 = vsel %vm246, %v330, %v306
    %v332 = vsel %vm245, %v226, %v329
    %v333 = vsel %vm245, 0, %v331
    %v334 = vcosq.f32.pop %v332
    %v335 = vsinq.f32.pop %v332
    %vm336 = vweird.f32 %v226
    %v337 = vand.u32 %v333, 3
    %vm338 = vcmp.lt.s32.totalorder %v337, 2
    %vm339 = vcmp.eq.s32.totalorder %v337, 0
    %v340 = vxor.u32 %v335, 2147483648
    %v341 = vsel %vm339, %v334, %v340
    %vm342 = vcmp.eq.s32.totalorder %v337, 2
    %v343 = vxor.u32 %v334, 2147483648
    %v344 = vsel %vm342, %v343, %v335
    %v345 = vsel %vm338, %v341, %v344
    %v346 = vsel %vm336, nan, %v345
    %v347 = vand.u32 2147483647, %v229
    %vm348 = vcmp.le.f32.partialorder %v347, 0.7853982
    %vm349 = vcmp.lt.s32.totalorder %v229, 0
    %v350 = vand.u32 %v229, 2139095040
    %v351 = vshrl.u32 %v350, 23
    %v352 = vsub.s32 %v351, 127
    %v353 = vand.u32 2147483647, %v229
    %v354 = vand.u32 %v353, 8388607
    %v355 = vor.u32 %v354, 8388608
    %v356 = vsub.s32 0, %v355
    %v357 = vadd.s32 %v352, 1
    %vm358 = vcmp.gt.s32.totalorder %v357, 0
    %v359 = vsel %vm358, %v357, 0
    %v360 = vshrl.u32 %v359, 5
    %v361 = vand.u32 %v359, 31
    %v362 = vsub.s32 32, %v361
    %v363 = vshrl.u32 683565275, %v362
    %v364 = vshll.u32 683565275, %v361
    %v365 = vshrl.u32 2475754826, %v362
    %v366 = vor.u32 %v364, %v365
    %v367 = vshll.u32 2475754826, %v361
    %v368 = vshrl.u32 2131351028, %v362
    %v369 = vor.u32 %v367, %v368
    %v370 = vshll.u32 2131351028, %v361
    %v371 = vshrl.u32 2102212464, %v362
    %v372 = vor.u32 %v370, %v371
    %v373 = vshll.u32 2102212464, %v361
    %v374 = vshrl.u32 920167782, %v362
    %v375 = vor.u32 %v373, %v374
    %v376 = vshll.u32 920167782, %v361
    %v377 = vshrl.u32 1326507024, %v362
    %v378 = vor.u32 %v376, %v377
    %vm379 = vcmp.lt.s32.totalorder %v360, 1
    %vm380 = vcmp.lt.s32.totalorder %v360, 2
    %vm381 = vcmp.lt.s32.totalorder %v360, 3
    %vm382 = vcmp.lt.s32.totalorder %v360, 4
    %v383 = vsel %vm379, %v363, %v366
    %v384 = vsel %vm382, %v372, 2102212464
    %v385 = vsel %vm381, %v369, %v384
    %v386 = vsel %vm380, %v383, %v385
    %v387 = vsel %vm379, %v366, %v369
    %v388 = vsel %vm382, %v375, 920167782
    %v389 = vsel %vm381, %v372, %v388
    %v390 = vsel %vm380, %v387, %v389
    %v391 = vsel %vm379, %v369, %v372
    %v392 = vsel %vm382, %v378, 1326507024
    %v393 = vsel %vm381, %v375, %v392
    %v394 = vsel %vm380, %v391, %v393
    %v395 = vshll.u32 %v355, 8
    %v396 = vmul.u32.u64.compose %v395, %v394
    %v397 = vextract.low.u32 %v396
    %v398 = vextract.high.u32 %v396
    %v399 = vmul.u32.u64.compose %v395, %v390
    %v400 = vextract.low.u32 %v399
    %v401 = vextract.high.u32 %v399
    %v402 = vmul.u32 %v395, %v386
    %v403 = vadd.s32 %v398, %v400
    %vm404 = vc.u32 %v398, %v400
    %v405 = vadd.s32 %v401, 1
    %v406 = vsel %vm404, %v405, %v401
    %v407 = vadd.s32 %v402, %v406
    %v408 = vadd.s32 %v407, 536870912
    %v409 = vshrl.u32 %v408, 30
    %v410 = vshll.u32 %v409, 30
    %v411 = vsub.s32 %v407, %v410
    %vm412 = vcmp.lt.s32.totalorder %v411, 0
    %v413 = vsub.s32 0, %v411
    %v414 = vsel %vm412, %v413, %v411
    %v415 = vclz %v414
    %v416 = vsub.s32 %v415, 2
    %vm417 = vcmp.gt.s32.totalorder 0, %v416
    %v418 = vsel %vm417, 0, %v416
    %v419 = vsub.s32 32, %v418
    %v420 = vshll.u32 %v411, %v418
    %v421 = vshrl.u32 %v403, %v419
    %v422 = vor.u32 %v420, %v421
    %v423 = vsub.s32 4294967266, %v418
    %v424 = vadd.s32 %v423, 127
    %v425 = vshll.u32 %v424, 23
    %v426 = vor.u32 4788187, %v425
    %v427 = vand.u32 2147483647, %v426
    %v429 = vcvt.s32.f32 %v422
    %v430 = vmul.f32 %v429, %v427
    %v431 = vxor.u32 %v430, 2147483648
    %v432 = vsel %vm349, %v431, %v430
    %v433 = vsub.s32 4, %v409
    %v434 = vsel %vm349, %v433, %v409
    %v435 = vsel %vm348, %v229, %v432
    %v436 = vsel %vm348, 0, %v434
    %v437 = vcosq.f32.pop %v435
    %v438 = vsinq.f32.pop %v435
    %vm439 = vweird.f32 %v229
    %v440 = vand.u32 %v436, 3
    %vm441 = vcmp.lt.s32.totalorder %v440, 2
    %vm442 = vcmp.eq.s32.totalorder %v440, 0
    %v443 = vxor.u32 %v438, 2147483648
    %v444 = vsel %vm442, %v437, %v443
    %vm445 = vcmp.eq.s32.totalorder %v440, 2
    %v446 = vxor.u32 %v437, 2147483648
    %v447 = vsel %vm445, %v446, %v438
    %v448 = vsel %vm441, %v444, %v447
    %v449 = vsel %vm439, nan, %v448
    %v450 = vand.u32 2147483647, %v232
    %vm451 = vcmp.le.f32.partialorder %v450, 0.7853982
    %vm452 = vcmp.lt.s32.totalorder %v232, 0
    %v453 = vand.u32 %v232, 2139095040
    %v454 = vshrl.u32 %v453, 23
    %v455 = vsub.s32 %v454, 127
    %v456 = vand.u32 2147483647, %v232
    %v457 = vand.u32 %v456, 8388607
    %v458 = vor.u32 %v457, 8388608
    %v459 = vsub.s32 0, %v458
    %v460 = vadd.s32 %v455, 1
    %vm461 = vcmp.gt.s32.totalorder %v460, 0
    %v462 = vsel %vm461, %v460, 0
    %v463 = vshrl.u32 %v462, 5
    %v464 = vand.u32 %v462, 31
    %v465 = vsub.s32 32, %v464
    %v466 = vshrl.u32 683565275, %v465
    %v467 = vshll.u32 683565275, %v464
    %v468 = vshrl.u32 2475754826, %v465
    %v469 = vor.u32 %v467, %v468
    %v470 = vshll.u32 2475754826, %v464
    %v471 = vshrl.u32 2131351028, %v465
    %v472 = vor.u32 %v470, %v471
    %v473 = vshll.u32 2131351028, %v464
    %v474 = vshrl.u32 2102212464, %v465
    %v475 = vor.u32 %v473, %v474
    %v476 = vshll.u32 2102212464, %v464
    %v477 = vshrl.u32 920167782, %v465
    %v478 = vor.u32 %v476, %v477
    %v479 = vshll.u32 920167782, %v464
    %v480 = vshrl.u32 1326507024, %v465
    %v481 = vor.u32 %v479, %v480
    %vm482 = vcmp.lt.s32.totalorder %v463, 1
    %vm483 = vcmp.lt.s32.totalorder %v463, 2
    %vm484 = vcmp.lt.s32.totalorder %v463, 3
    %vm485 = vcmp.lt.s32.totalorder %v463, 4
    %v486 = vsel %vm482, %v466, %v469
    %v487 = vsel %vm485, %v475, 2102212464
    %v488 = vsel %vm484, %v472, %v487
    %v489 = vsel %vm483, %v486, %v488
    %v490 = vsel %vm482, %v469, %v472
    %v491 = vsel %vm485, %v478, 920167782
    %v492 = vsel %vm484, %v475, %v491
    %v493 = vsel %vm483, %v490, %v492
    %v494 = vsel %vm482, %v472, %v475
    %v495 = vsel %vm485, %v481, 1326507024
    %v496 = vsel %vm484, %v478, %v495
    %v497 = vsel %vm483, %v494, %v496
    %v498 = vshll.u32 %v458, 8
    %v499 = vmul.u32.u64.compose %v498, %v497
    %v500 = vextract.low.u32 %v499
    %v501 = vextract.high.u32 %v499
    %v502 = vmul.u32.u64.compose %v498, %v493
    %v503 = vextract.low.u32 %v502
    %v504 = vextract.high.u32 %v502
    %v505 = vmul.u32 %v498, %v489
    %v506 = vadd.s32 %v501, %v503
    %vm507 = vc.u32 %v501, %v503
    %v508 = vadd.s32 %v504, 1
    %v509 = vsel %vm507, %v508, %v504
    %v510 = vadd.s32 %v505, %v509
    %v511 = vadd.s32 %v510, 536870912
    %v512 = vshrl.u32 %v511, 30
    %v513 = vshll.u32 %v512, 30
    %v514 = vsub.s32 %v510, %v513
    %vm515 = vcmp.lt.s32.totalorder %v514, 0
    %v516 = vsub.s32 0, %v514
    %v517 = vsel %vm515, %v516, %v514
    %v518 = vclz %v517
    %v519 = vsub.s32 %v518, 2
    %vm520 = vcmp.gt.s32.totalorder 0, %v519
    %v521 = vsel %vm520, 0, %v519
    %v522 = vsub.s32 32, %v521
    %v523 = vshll.u32 %v514, %v521
    %v524 = vshrl.u32 %v506, %v522
    %v525 = vor.u32 %v523, %v524
    %v526 = vsub.s32 4294967266, %v521
    %v527 = vadd.s32 %v526, 127
    %v528 = vshll.u32 %v527, 23
    %v529 = vor.u32 4788187, %v528
    %v530 = vand.u32 2147483647, %v529
    %v532 = vcvt.s32.f32 %v525
    %v533 = vmul.f32 %v532, %v530
    %v534 = vxor.u32 %v533, 2147483648
    %v535 = vsel %vm452, %v534, %v533
    %v536 = vsub.s32 4, %v512
    %v537 = vsel %vm452, %v536, %v512
    %v538 = vsel %vm451, %v232, %v535
    %v539 = vsel %vm451, 0, %v537
    %v540 = vcosq.f32.pop %v538
    %v541 = vsinq.f32.pop %v538
    %vm542 = vweird.f32 %v232
    %v543 = vand.u32 %v539, 3
    %vm544 = vcmp.lt.s32.totalorder %v543, 2
    %vm545 = vcmp.eq.s32.totalorder %v543, 0
    %v546 = vxor.u32 %v541, 2147483648
    %v547 = vsel %vm545, %v540, %v546
    %vm548 = vcmp.eq.s32.totalorder %v543, 2
    %v549 = vxor.u32 %v540, 2147483648
    %v550 = vsel %vm548, %v549, %v541
    %v551 = vsel %vm544, %v547, %v550
    %v552 = vsel %vm542, nan, %v551
    %v553 = vand.u32 2147483647, %v235
    %vm554 = vcmp.le.f32.partialorder %v553, 0.7853982
    %vm555 = vcmp.lt.s32.totalorder %v235, 0
    %v556 = vand.u32 %v235, 2139095040
    %v557 = vshrl.u32 %v556, 23
    %v558 = vsub.s32 %v557, 127
    %v559 = vand.u32 2147483647, %v235
    %v560 = vand.u32 %v559, 8388607
    %v561 = vor.u32 %v560, 8388608
    %v562 = vsub.s32 0, %v561
    %v563 = vadd.s32 %v558, 1
    %vm564 = vcmp.gt.s32.totalorder %v563, 0
    %v565 = vsel %vm564, %v563, 0
    %v566 = vshrl.u32 %v565, 5
    %v567 = vand.u32 %v565, 31
    %v568 = vsub.s32 32, %v567
    %v569 = vshrl.u32 683565275, %v568
    %v570 = vshll.u32 683565275, %v567
    %v571 = vshrl.u32 2475754826, %v568
    %v572 = vor.u32 %v570, %v571
    %v573 = vshll.u32 2475754826, %v567
    %v574 = vshrl.u32 2131351028, %v568
    %v575 = vor.u32 %v573, %v574
    %v576 = vshll.u32 2131351028, %v567
    %v577 = vshrl.u32 2102212464, %v568
    %v578 = vor.u32 %v576, %v577
    %v579 = vshll.u32 2102212464, %v567
    %v580 = vshrl.u32 920167782, %v568
    %v581 = vor.u32 %v579, %v580
    %v582 = vshll.u32 920167782, %v567
    %v583 = vshrl.u32 1326507024, %v568
    %v584 = vor.u32 %v582, %v583
    %vm585 = vcmp.lt.s32.totalorder %v566, 1
    %vm586 = vcmp.lt.s32.totalorder %v566, 2
    %vm587 = vcmp.lt.s32.totalorder %v566, 3
    %vm588 = vcmp.lt.s32.totalorder %v566, 4
    %v589 = vsel %vm585, %v569, %v572
    %v590 = vsel %vm588, %v578, 2102212464
    %v591 = vsel %vm587, %v575, %v590
    %v592 = vsel %vm586, %v589, %v591
    %v593 = vsel %vm585, %v572, %v575
    %v594 = vsel %vm588, %v581, 920167782
    %v595 = vsel %vm587, %v578, %v594
    %v596 = vsel %vm586, %v593, %v595
    %v597 = vsel %vm585, %v575, %v578
    %v598 = vsel %vm588, %v584, 1326507024
    %v599 = vsel %vm587, %v581, %v598
    %v600 = vsel %vm586, %v597, %v599
    %v601 = vshll.u32 %v561, 8
    %v602 = vmul.u32.u64.compose %v601, %v600
    %v603 = vextract.low.u32 %v602
    %v604 = vextract.high.u32 %v602
    %v605 = vmul.u32.u64.compose %v601, %v596
    %v606 = vextract.low.u32 %v605
    %v607 = vextract.high.u32 %v605
    %v608 = vmul.u32 %v601, %v592
    %v609 = vadd.s32 %v604, %v606
    %vm610 = vc.u32 %v604, %v606
    %v611 = vadd.s32 %v607, 1
    %v612 = vsel %vm610, %v611, %v607
    %v613 = vadd.s32 %v608, %v612
    %v614 = vadd.s32 %v613, 536870912
    %v615 = vshrl.u32 %v614, 30
    %v616 = vshll.u32 %v615, 30
    %v617 = vsub.s32 %v613, %v616
    %vm618 = vcmp.lt.s32.totalorder %v617, 0
    %v619 = vsub.s32 0, %v617
    %v620 = vsel %vm618, %v619, %v617
    %v621 = vclz %v620
    %v622 = vsub.s32 %v621, 2
    %vm623 = vcmp.gt.s32.totalorder 0, %v622
    %v624 = vsel %vm623, 0, %v622
    %v625 = vsub.s32 32, %v624
    %v626 = vshll.u32 %v617, %v624
    %v627 = vshrl.u32 %v609, %v625
    %v628 = vor.u32 %v626, %v627
    %v629 = vsub.s32 4294967266, %v624
    %v630 = vadd.s32 %v629, 127
    %v631 = vshll.u32 %v630, 23
    %v632 = vor.u32 4788187, %v631
    %v633 = vand.u32 2147483647, %v632
    %v635 = vcvt.s32.f32 %v628
    %v636 = vmul.f32 %v635, %v633
    %v637 = vxor.u32 %v636, 2147483648
    %v638 = vsel %vm555, %v637, %v636
    %v639 = vsub.s32 4, %v615
    %v640 = vsel %vm555, %v639, %v615
    %v641 = vsel %vm554, %v235, %v638
    %v642 = vsel %vm554, 0, %v640
    %v643 = vcosq.f32.pop %v641
    %v644 = vsinq.f32.pop %v641
    %vm645 = vweird.f32 %v235
    %v646 = vand.u32 %v642, 3
    %vm647 = vcmp.lt.s32.totalorder %v646, 2
    %vm648 = vcmp.eq.s32.totalorder %v646, 0
    %v649 = vxor.u32 %v644, 2147483648
    %v650 = vsel %vm648, %v643, %v649
    %vm651 = vcmp.eq.s32.totalorder %v646, 2
    %v652 = vxor.u32 %v643, 2147483648
    %v653 = vsel %vm651, %v652, %v644
    %v654 = vsel %vm647, %v650, %v653
    %v655 = vsel %vm645, nan, %v654
    %v656 = vmul.f32 %v237, %v346
    %v657 = vmul.f32 %v239, %v449
    %v658 = vmul.f32 %v241, %v552
    %v659 = vmul.f32 %v243, %v655
    %660 = vst [vmem:[#allocation5] sm:$0xff] %v656
    %661 = vst [vmem:[#allocation5 + $0x8] sm:$0xff] %v657
    %662 = vst [vmem:[#allocation5 + $0x10] sm:$0xff] %v658
    %663 = vst [vmem:[#allocation5 + $0x18] sm:$0xff] %v659
    %v664 = vand.u32 2147483647, %v226
    %vm665 = vcmp.le.f32.partialorder %v664, 0.7853982
    %vm666 = vcmp.lt.s32.totalorder %v226, 0
    %v667 = vand.u32 %v226, 2139095040
    %v668 = vshrl.u32 %v667, 23
    %v669 = vsub.s32 %v668, 127
    %v670 = vand.u32 2147483647, %v226
    %v671 = vand.u32 %v670, 8388607
    %v672 = vor.u32 %v671, 8388608
    %v673 = vsub.s32 0, %v672
    %v674 = vadd.s32 %v669, 1
    %vm675 = vcmp.gt.s32.totalorder %v674, 0
    %v676 = vsel %vm675, %v674, 0
    %v677 = vshrl.u32 %v676, 5
    %v678 = vand.u32 %v676, 31
    %v679 = vsub.s32 32, %v678
    %v680 = vshrl.u32 683565275, %v679
    %v681 = vshll.u32 683565275, %v678
    %v682 = vshrl.u32 2475754826, %v679
    %v683 = vor.u32 %v681, %v682
    %v684 = vshll.u32 2475754826, %v678
    %v685 = vshrl.u32 2131351028, %v679
    %v686 = vor.u32 %v684, %v685
    %v687 = vshll.u32 2131351028, %v678
    %v688 = vshrl.u32 2102212464, %v679
    %v689 = vor.u32 %v687, %v688
    %v690 = vshll.u32 2102212464, %v678
    %v691 = vshrl.u32 920167782, %v679
    %v692 = vor.u32 %v690, %v691
    %v693 = vshll.u32 920167782, %v678
    %v694 = vshrl.u32 1326507024, %v679
    %v695 = vor.u32 %v693, %v694
    %vm696 = vcmp.lt.s32.totalorder %v677, 1
    %vm697 = vcmp.lt.s32.totalorder %v677, 2
    %vm698 = vcmp.lt.s32.totalorder %v677, 3
    %vm699 = vcmp.lt.s32.totalorder %v677, 4
    %v700 = vsel %vm696, %v680, %v683
    %v701 = vsel %vm699, %v689, 2102212464
    %v702 = vsel %vm698, %v686, %v701
    %v703 = vsel %vm697, %v700, %v702
    %v704 = vsel %vm696, %v683, %v686
    %v705 = vsel %vm699, %v692, 920167782
    %v706 = vsel %vm698, %v689, %v705
    %v707 = vsel %vm697, %v704, %v706
    %v708 = vsel %vm696, %v686, %v689
    %v709 = vsel %vm699, %v695, 1326507024
    %v710 = vsel %vm698, %v692, %v709
    %v711 = vsel %vm697, %v708, %v710
    %v712 = vshll.u32 %v672, 8
    %v713 = vmul.u32.u64.compose %v712, %v711
    %v714 = vextract.low.u32 %v713
    %v715 = vextract.high.u32 %v713
    %v716 = vmul.u32.u64.compose %v712, %v707
    %v717 = vextract.low.u32 %v716
    %v718 = vextract.high.u32 %v716
    %v719 = vmul.u32 %v712, %v703
    %v720 = vadd.s32 %v715, %v717
    %vm721 = vc.u32 %v715, %v717
    %v722 = vadd.s32 %v718, 1
    %v723 = vsel %vm721, %v722, %v718
    %v724 = vadd.s32 %v719, %v723
    %v725 = vadd.s32 %v724, 536870912
    %v726 = vshrl.u32 %v725, 30
    %v727 = vshll.u32 %v726, 30
    %v728 = vsub.s32 %v724, %v727
    %vm729 = vcmp.lt.s32.totalorder %v728, 0
    %v730 = vsub.s32 0, %v728
    %v731 = vsel %vm729, %v730, %v728
    %v732 = vclz %v731
    %v733 = vsub.s32 %v732, 2
    %vm734 = vcmp.gt.s32.totalorder 0, %v733
    %v735 = vsel %vm734, 0, %v733
    %v736 = vsub.s32 32, %v735
    %v737 = vshll.u32 %v728, %v735
    %v738 = vshrl.u32 %v720, %v736
    %v739 = vor.u32 %v737, %v738
    %v740 = vsub.s32 4294967266, %v735
    %v741 = vadd.s32 %v740, 127
    %v742 = vshll.u32 %v741, 23
    %v743 = vor.u32 4788187, %v742
    %v744 = vand.u32 2147483647, %v743
    %v746 = vcvt.s32.f32 %v739
    %v747 = vmul.f32 %v746, %v744
    %v748 = vxor.u32 %v747, 2147483648
    %v749 = vsel %vm666, %v748, %v747
    %v750 = vsub.s32 4, %v726
    %v751 = vsel %vm666, %v750, %v726
    %v752 = vsel %vm665, %v226, %v749
    %v753 = vsel %vm665, 0, %v751
    %v754 = vcosq.f32.pop %v752
    %v755 = vsinq.f32.pop %v752
    %vm756 = vweird.f32 %v226
    %v757 = vadd.s32 %v753, 3
    %v758 = vand.u32 %v757, 3
    %vm759 = vcmp.lt.s32.totalorder %v758, 2
    %vm760 = vcmp.eq.s32.totalorder %v758, 0
    %v761 = vxor.u32 %v755, 2147483648
    %v762 = vsel %vm760, %v754, %v761
    %vm763 = vcmp.eq.s32.totalorder %v758, 2
    %v764 = vxor.u32 %v754, 2147483648
    %v765 = vsel %vm763, %v764, %v755
    %v766 = vsel %vm759, %v762, %v765
    %v767 = vsel %vm756, nan, %v766
    %v768 = vand.u32 2147483647, %v229
    %vm769 = vcmp.le.f32.partialorder %v768, 0.7853982
    %vm770 = vcmp.lt.s32.totalorder %v229, 0
    %v771 = vand.u32 %v229, 2139095040
    %v772 = vshrl.u32 %v771, 23
    %v773 = vsub.s32 %v772, 127
    %v774 = vand.u32 2147483647, %v229
    %v775 = vand.u32 %v774, 8388607
    %v776 = vor.u32 %v775, 8388608
    %v777 = vsub.s32 0, %v776
    %v778 = vadd.s32 %v773, 1
    %vm779 = vcmp.gt.s32.totalorder %v778, 0
    %v780 = vsel %vm779, %v778, 0
    %v781 = vshrl.u32 %v780, 5
    %v782 = vand.u32 %v780, 31
    %v783 = vsub.s32 32, %v782
    %v784 = vshrl.u32 683565275, %v783
    %v785 = vshll.u32 683565275, %v782
    %v786 = vshrl.u32 2475754826, %v783
    %v787 = vor.u32 %v785, %v786
    %v788 = vshll.u32 2475754826, %v782
    %v789 = vshrl.u32 2131351028, %v783
    %v790 = vor.u32 %v788, %v789
    %v791 = vshll.u32 2131351028, %v782
    %v792 = vshrl.u32 2102212464, %v783
    %v793 = vor.u32 %v791, %v792
    %v794 = vshll.u32 2102212464, %v782
    %v795 = vshrl.u32 920167782, %v783
    %v796 = vor.u32 %v794, %v795
    %v797 = vshll.u32 920167782, %v782
    %v798 = vshrl.u32 1326507024, %v783
    %v799 = vor.u32 %v797, %v798
    %vm800 = vcmp.lt.s32.totalorder %v781, 1
    %vm801 = vcmp.lt.s32.totalorder %v781, 2
    %vm802 = vcmp.lt.s32.totalorder %v781, 3
    %vm803 = vcmp.lt.s32.totalorder %v781, 4
    %v804 = vsel %vm800, %v784, %v787
    %v805 = vsel %vm803, %v793, 2102212464
    %v806 = vsel %vm802, %v790, %v805
    %v807 = vsel %vm801, %v804, %v806
    %v808 = vsel %vm800, %v787, %v790
    %v809 = vsel %vm803, %v796, 920167782
    %v810 = vsel %vm802, %v793, %v809
    %v811 = vsel %vm801, %v808, %v810
    %v812 = vsel %vm800, %v790, %v793
    %v813 = vsel %vm803, %v799, 1326507024
    %v814 = vsel %vm802, %v796, %v813
    %v815 = vsel %vm801, %v812, %v814
    %v816 = vshll.u32 %v776, 8
    %v817 = vmul.u32.u64.compose %v816, %v815
    %v818 = vextract.low.u32 %v817
    %v819 = vextract.high.u32 %v817
    %v820 = vmul.u32.u64.compose %v816, %v811
    %v821 = vextract.low.u32 %v820
    %v822 = vextract.high.u32 %v820
    %v823 = vmul.u32 %v816, %v807
    %v824 = vadd.s32 %v819, %v821
    %vm825 = vc.u32 %v819, %v821
    %v826 = vadd.s32 %v822, 1
    %v827 = vsel %vm825, %v826, %v822
    %v828 = vadd.s32 %v823, %v827
    %v829 = vadd.s32 %v828, 536870912
    %v830 = vshrl.u32 %v829, 30
    %v831 = vshll.u32 %v830, 30
    %v832 = vsub.s32 %v828, %v831
    %vm833 = vcmp.lt.s32.totalorder %v832, 0
    %v834 = vsub.s32 0, %v832
    %v835 = vsel %vm833, %v834, %v832
    %v836 = vclz %v835
    %v837 = vsub.s32 %v836, 2
    %vm838 = vcmp.gt.s32.totalorder 0, %v837
    %v839 = vsel %vm838, 0, %v837
    %v840 = vsub.s32 32, %v839
    %v841 = vshll.u32 %v832, %v839
    %v842 = vshrl.u32 %v824, %v840
    %v843 = vor.u32 %v841, %v842
    %v844 = vsub.s32 4294967266, %v839
    %v845 = vadd.s32 %v844, 127
    %v846 = vshll.u32 %v845, 23
    %v847 = vor.u32 4788187, %v846
    %v848 = vand.u32 2147483647, %v847
    %v850 = vcvt.s32.f32 %v843
    %v851 = vmul.f32 %v850, %v848
    %v852 = vxor.u32 %v851, 2147483648
    %v853 = vsel %vm770, %v852, %v851
    %v854 = vsub.s32 4, %v830
    %v855 = vsel %vm770, %v854, %v830
    %v856 = vsel %vm769, %v229, %v853
    %v857 = vsel %vm769, 0, %v855
    %v858 = vcosq.f32.pop %v856
    %v859 = vsinq.f32.pop %v856
    %vm860 = vweird.f32 %v229
    %v861 = vadd.s32 %v857, 3
    %v862 = vand.u32 %v861, 3
    %vm863 = vcmp.lt.s32.totalorder %v862, 2
    %vm864 = vcmp.eq.s32.totalorder %v862, 0
    %v865 = vxor.u32 %v859, 2147483648
    %v866 = vsel %vm864, %v858, %v865
    %vm867 = vcmp.eq.s32.totalorder %v862, 2
    %v868 = vxor.u32 %v858, 2147483648
    %v869 = vsel %vm867, %v868, %v859
    %v870 = vsel %vm863, %v866, %v869
    %v871 = vsel %vm860, nan, %v870
    %v872 = vand.u32 2147483647, %v232
    %vm873 = vcmp.le.f32.partialorder %v872, 0.7853982
    %vm874 = vcmp.lt.s32.totalorder %v232, 0
    %v875 = vand.u32 %v232, 2139095040
    %v876 = vshrl.u32 %v875, 23
    %v877 = vsub.s32 %v876, 127
    %v878 = vand.u32 2147483647, %v232
    %v879 = vand.u32 %v878, 8388607
    %v880 = vor.u32 %v879, 8388608
    %v881 = vsub.s32 0, %v880
    %v882 = vadd.s32 %v877, 1
    %vm883 = vcmp.gt.s32.totalorder %v882, 0
    %v884 = vsel %vm883, %v882, 0
    %v885 = vshrl.u32 %v884, 5
    %v886 = vand.u32 %v884, 31
    %v887 = vsub.s32 32, %v886
    %v888 = vshrl.u32 683565275, %v887
    %v889 = vshll.u32 683565275, %v886
    %v890 = vshrl.u32 2475754826, %v887
    %v891 = vor.u32 %v889, %v890
    %v892 = vshll.u32 2475754826, %v886
    %v893 = vshrl.u32 2131351028, %v887
    %v894 = vor.u32 %v892, %v893
    %v895 = vshll.u32 2131351028, %v886
    %v896 = vshrl.u32 2102212464, %v887
    %v897 = vor.u32 %v895, %v896
    %v898 = vshll.u32 2102212464, %v886
    %v899 = vshrl.u32 920167782, %v887
    %v900 = vor.u32 %v898, %v899
    %v901 = vshll.u32 920167782, %v886
    %v902 = vshrl.u32 1326507024, %v887
    %v903 = vor.u32 %v901, %v902
    %vm904 = vcmp.lt.s32.totalorder %v885, 1
    %vm905 = vcmp.lt.s32.totalorder %v885, 2
    %vm906 = vcmp.lt.s32.totalorder %v885, 3
    %vm907 = vcmp.lt.s32.totalorder %v885, 4
    %v908 = vsel %vm904, %v888, %v891
    %v909 = vsel %vm907, %v897, 2102212464
    %v910 = vsel %vm906, %v894, %v909
    %v911 = vsel %vm905, %v908, %v910
    %v912 = vsel %vm904, %v891, %v894
    %v913 = vsel %vm907, %v900, 920167782
    %v914 = vsel %vm906, %v897, %v913
    %v915 = vsel %vm905, %v912, %v914
    %v916 = vsel %vm904, %v894, %v897
    %v917 = vsel %vm907, %v903, 1326507024
    %v918 = vsel %vm906, %v900, %v917
    %v919 = vsel %vm905, %v916, %v918
    %v920 = vshll.u32 %v880, 8
    %v921 = vmul.u32.u64.compose %v920, %v919
    %v922 = vextract.low.u32 %v921
    %v923 = vextract.high.u32 %v921
    %v924 = vmul.u32.u64.compose %v920, %v915
    %v925 = vextract.low.u32 %v924
    %v926 = vextract.high.u32 %v924
    %v927 = vmul.u32 %v920, %v911
    %v928 = vadd.s32 %v923, %v925
    %vm929 = vc.u32 %v923, %v925
    %v930 = vadd.s32 %v926, 1
    %v931 = vsel %vm929, %v930, %v926
    %v932 = vadd.s32 %v927, %v931
    %v933 = vadd.s32 %v932, 536870912
    %v934 = vshrl.u32 %v933, 30
    %v935 = vshll.u32 %v934, 30
    %v936 = vsub.s32 %v932, %v935
    %vm937 = vcmp.lt.s32.totalorder %v936, 0
    %v938 = vsub.s32 0, %v936
    %v939 = vsel %vm937, %v938, %v936
    %v940 = vclz %v939
    %v941 = vsub.s32 %v940, 2
    %vm942 = vcmp.gt.s32.totalorder 0, %v941
    %v943 = vsel %vm942, 0, %v941
    %v944 = vsub.s32 32, %v943
    %v945 = vshll.u32 %v936, %v943
    %v946 = vshrl.u32 %v928, %v944
    %v947 = vor.u32 %v945, %v946
    %v948 = vsub.s32 4294967266, %v943
    %v949 = vadd.s32 %v948, 127
    %v950 = vshll.u32 %v949, 23
    %v951 = vor.u32 4788187, %v950
    %v952 = vand.u32 2147483647, %v951
    %v954 = vcvt.s32.f32 %v947
    %v955 = vmul.f32 %v954, %v952
    %v956 = vxor.u32 %v955, 2147483648
    %v957 = vsel %vm874, %v956, %v955
    %v958 = vsub.s32 4, %v934
    %v959 = vsel %vm874, %v958, %v934
    %v960 = vsel %vm873, %v232, %v957
    %v961 = vsel %vm873, 0, %v959
    %v962 = vcosq.f32.pop %v960
    %v963 = vsinq.f32.pop %v960
    %vm964 = vweird.f32 %v232
    %v965 = vadd.s32 %v961, 3
    %v966 = vand.u32 %v965, 3
    %vm967 = vcmp.lt.s32.totalorder %v966, 2
    %vm968 = vcmp.eq.s32.totalorder %v966, 0
    %v969 = vxor.u32 %v963, 2147483648
    %v970 = vsel %vm968, %v962, %v969
    %vm971 = vcmp.eq.s32.totalorder %v966, 2
    %v972 = vxor.u32 %v962, 2147483648
    %v973 = vsel %vm971, %v972, %v963
    %v974 = vsel %vm967, %v970, %v973
    %v975 = vsel %vm964, nan, %v974
    %v976 = vand.u32 2147483647, %v235
    %vm977 = vcmp.le.f32.partialorder %v976, 0.7853982
    %vm978 = vcmp.lt.s32.totalorder %v235, 0
    %v979 = vand.u32 %v235, 2139095040
    %v980 = vshrl.u32 %v979, 23
    %v981 = vsub.s32 %v980, 127
    %v982 = vand.u32 2147483647, %v235
    %v983 = vand.u32 %v982, 8388607
    %v984 = vor.u32 %v983, 8388608
    %v985 = vsub.s32 0, %v984
    %v986 = vadd.s32 %v981, 1
    %vm987 = vcmp.gt.s32.totalorder %v986, 0
    %v988 = vsel %vm987, %v986, 0
    %v989 = vshrl.u32 %v988, 5
    %v990 = vand.u32 %v988, 31
    %v991 = vsub.s32 32, %v990
    %v992 = vshrl.u32 683565275, %v991
    %v993 = vshll.u32 683565275, %v990
    %v994 = vshrl.u32 2475754826, %v991
    %v995 = vor.u32 %v993, %v994
    %v996 = vshll.u32 2475754826, %v990
    %v997 = vshrl.u32 2131351028, %v991
    %v998 = vor.u32 %v996, %v997
    %v999 = vshll.u32 2131351028, %v990
    %v1000 = vshrl.u32 2102212464, %v991
    %v1001 = vor.u32 %v999, %v1000
    %v1002 = vshll.u32 2102212464, %v990
    %v1003 = vshrl.u32 920167782, %v991
    %v1004 = vor.u32 %v1002, %v1003
    %v1005 = vshll.u32 920167782, %v990
    %v1006 = vshrl.u32 1326507024, %v991
    %v1007 = vor.u32 %v1005, %v1006
    %vm1008 = vcmp.lt.s32.totalorder %v989, 1
    %vm1009 = vcmp.lt.s32.totalorder %v989, 2
    %vm1010 = vcmp.lt.s32.totalorder %v989, 3
    %vm1011 = vcmp.lt.s32.totalorder %v989, 4
    %v1012 = vsel %vm1008, %v992, %v995
    %v1013 = vsel %vm1011, %v1001, 2102212464
    %v1014 = vsel %vm1010, %v998, %v1013
    %v1015 = vsel %vm1009, %v1012, %v1014
    %v1016 = vsel %vm1008, %v995, %v998
    %v1017 = vsel %vm1011, %v1004, 920167782
    %v1018 = vsel %vm1010, %v1001, %v1017
    %v1019 = vsel %vm1009, %v1016, %v1018
    %v1020 = vsel %vm1008, %v998, %v1001
    %v1021 = vsel %vm1011, %v1007, 1326507024
    %v1022 = vsel %vm1010, %v1004, %v1021
    %v1023 = vsel %vm1009, %v1020, %v1022
    %v1024 = vshll.u32 %v984, 8
    %v1025 = vmul.u32.u64.compose %v1024, %v1023
    %v1026 = vextract.low.u32 %v1025
    %v1027 = vextract.high.u32 %v1025
    %v1028 = vmul.u32.u64.compose %v1024, %v1019
    %v1029 = vextract.low.u32 %v1028
    %v1030 = vextract.high.u32 %v1028
    %v1031 = vmul.u32 %v1024, %v1015
    %v1032 = vadd.s32 %v1027, %v1029
    %vm1033 = vc.u32 %v1027, %v1029
    %v1034 = vadd.s32 %v1030, 1
    %v1035 = vsel %vm1033, %v1034, %v1030
    %v1036 = vadd.s32 %v1031, %v1035
    %v1037 = vadd.s32 %v1036, 536870912
    %v1038 = vshrl.u32 %v1037, 30
    %v1039 = vshll.u32 %v1038, 30
    %v1040 = vsub.s32 %v1036, %v1039
    %vm1041 = vcmp.lt.s32.totalorder %v1040, 0
    %v1042 = vsub.s32 0, %v1040
    %v1043 = vsel %vm1041, %v1042, %v1040
    %v1044 = vclz %v1043
    %v1045 = vsub.s32 %v1044, 2
    %vm1046 = vcmp.gt.s32.totalorder 0, %v1045
    %v1047 = vsel %vm1046, 0, %v1045
    %v1048 = vsub.s32 32, %v1047
    %v1049 = vshll.u32 %v1040, %v1047
    %v1050 = vshrl.u32 %v1032, %v1048
    %v1051 = vor.u32 %v1049, %v1050
    %v1052 = vsub.s32 4294967266, %v1047
    %v1053 = vadd.s32 %v1052, 127
    %v1054 = vshll.u32 %v1053, 23
    %v1055 = vor.u32 4788187, %v1054
    %v1056 = vand.u32 2147483647, %v1055
    %v1058 = vcvt.s32.f32 %v1051
    %v1059 = vmul.f32 %v1058, %v1056
    %v1060 = vxor.u32 %v1059, 2147483648
    %v1061 = vsel %vm978, %v1060, %v1059
    %v1062 = vsub.s32 4, %v1038
    %v1063 = vsel %vm978, %v1062, %v1038
    %v1064 = vsel %vm977, %v235, %v1061
    %v1065 = vsel %vm977, 0, %v1063
    %v1066 = vcosq.f32.pop %v1064
    %v1067 = vsinq.f32.pop %v1064
    %vm1068 = vweird.f32 %v235
    %v1069 = vadd.s32 %v1065, 3
    %v1070 = vand.u32 %v1069, 3
    %vm1071 = vcmp.lt.s32.totalorder %v1070, 2
    %vm1072 = vcmp.eq.s32.totalorder %v1070, 0
    %v1073 = vxor.u32 %v1067, 2147483648
    %v1074 = vsel %vm1072, %v1066, %v1073
    %vm1075 = vcmp.eq.s32.totalorder %v1070, 2
    %v1076 = vxor.u32 %v1066, 2147483648
    %v1077 = vsel %vm1075, %v1076, %v1067
    %v1078 = vsel %vm1071, %v1074, %v1077
    %v1079 = vsel %vm1068, nan, %v1078
    %v1080 = vmul.f32 %v237, %v767
    %v1081 = vmul.f32 %v239, %v871
    %v1082 = vmul.f32 %v241, %v975
    %v1083 = vmul.f32 %v243, %v1079
    %s1084 = scalar_lea.vmem [#allocation5], 32
    %1085 = vst [vmem:[%s1084] sm:$0xff] %v1080
    %1086 = vst [vmem:[%s1084 + $0x8] sm:$0xff] %v1081
    %1087 = vst [vmem:[%s1084 + $0x10] sm:$0xff] %v1082
    %1088 = vst [vmem:[%s1084 + $0x18] sm:$0xff] %v1083
    // Predicated region
    $region18: #{tpu_custom_call.1} parent=1 // pred_check
      _
    $region19: #{tpu_custom_call.1} parent=1 // pred_check_branch
      %1090 = sbr.rel (0) target = $region21
    $region20: #{tpu_custom_call.1} parent=1 // pred_region
      %s1092 = ssub.s32 1024, 1024
      %1093 = vsyncadd [#allocation4], %s1092
      %s1094 = sshll.u32 [#allocation5], 4
      %s1095 = int_to_ptr.vmem [resolvable:$true] %s1094
      %1100 = dma.vmem_to_hbm [thread:$0]  %s1095, 1024, %s3, [#allocation4], 256, 256, 16
    $region21: #{tpu_custom_call.1} parent=1 // pred_fallthru
      _
    // Predicated region
    $region22: #{tpu_custom_call.1} parent=1 // pred_check
      _
    $region23: #{tpu_custom_call.1} parent=1 // pred_check_branch
      %1102 = sbr.rel (0) target = $region25
    $region24: #{tpu_custom_call.1} parent=1 // pred_region
      %1103 = dma.done [#allocation4], 1024
    $region25: #{tpu_custom_call.1} parent=1 // pred_fallthru
      _
    %1104 = vsyncpa [#allocation3], 1
    %1105 = vsyncpa [#allocation4], 1

</llo_original>
